<compile_context>
chip_gen: v7x
topology: tpu7x:2x2x1
jax: 0.10.0
libtpu: 0.0.40
codegen_flags: <defaults>
</compile_context>

<pallas_src>
import functools

import jax
import jax.numpy as jnp
from jax.experimental import pallas as pl
from jax.experimental.pallas import tpu as pltpu

_LANE = 128
_SUBLANE = 8
# Budget for the double-buffered weight block (per pipeline stage); keeps the
# kernel comfortably inside v7x's 64 MiB VMEM while tk stays large.
_WEIGHT_BUF_BUDGET = 6 * 1024 * 1024


def _round_up(v, m):
    return (v + m - 1) // m * m


def _tile_n(n):
    """Padded N and N-tile size (lane-dense, <= 512 per tile)."""
    np0 = _round_up(n, _LANE)
    if np0 <= 512:
        return np0, np0
    return _round_up(n, 512), 512


def _tile_k(k, tn, w_bytes):
    """Padded K and K-tile size so 2 * tk * tn * w_bytes <= budget."""
    max_tk = max(512, (_WEIGHT_BUF_BUDGET // (2 * tn * w_bytes)) // 512 * 512)
    tk = min(_round_up(k, 512), max_tk)
    return _round_up(k, tk), tk


def prepare_head_params(weight, bias, weight_dtype=jnp.bfloat16):
    """One-time parameter prep (call at init, NOT per forward).

    weight: [num_classes, input_dim]  (nn.Linear layout)
    bias:   [num_classes]
    Returns (wp [Kp, Np] in weight_dtype, bp [1, Np] f32), both zero-padded
    and lane-dense so the kernel streams them with unmasked loads.
    Use weight_dtype=jnp.float32 for exact nn.Linear numerics; the default
    bf16 halves weight HBM bytes (the kernel is weight-bandwidth bound) while
    keeping f32 accumulation.
    """
    n, k = weight.shape
    np_, tn = _tile_n(n)
    w_bytes = jnp.dtype(weight_dtype).itemsize
    kp, _ = _tile_k(k, tn, w_bytes)

    w_t = weight.T.astype(weight_dtype)                       # [K, N]
    wp = jnp.pad(w_t, ((0, kp - k), (0, np_ - n)))            # [Kp, Np]
    bp = jnp.pad(bias.astype(jnp.float32), (0, np_ - n)).reshape(1, np_)
    return wp, bp


def _head_kernel(x_ref, w_ref, b_ref, o_ref, acc_ref):
    # grid = (N tiles [parallel], K tiles [arbitrary/reduction, last])
    kk = pl.program_id(1)

    @pl.when(kk == 0)
    def _():
        acc_ref[...] = jnp.zeros_like(acc_ref)

    # bf16 (or f32) weight block, f32 accumulate on the MXU.
    acc_ref[...] += jnp.dot(
        x_ref[...],
        w_ref[...].astype(jnp.float32),
        preferred_element_type=jnp.float32,
    )

    @pl.when(kk == pl.num_programs(1) - 1)
    def _():
        o_ref[...] = (acc_ref[...] + b_ref[...]).astype(o_ref.dtype)


@functools.partial(jax.jit, static_argnums=(3,))
def head_forward(x, wp, bp, num_classes):
    """Head.forward: x @ W.T + b.

    x:  [B, K] activations (f32)
    wp: [Kp, Np] pre-padded transposed weight (from prepare_head_params)
    bp: [1, Np]  pre-padded bias
    Returns [B, num_classes].
    """
    batch, k = x.shape
    kp, np_ = wp.shape
    assert k <= kp, "input_dim larger than prepared weight"

    # Re-derive the (static) tiling from the prepared shapes.
    tn = np_ if np_ <= 512 else 512
    w_bytes = jnp.dtype(wp.dtype).itemsize
    kp_chk, tk = _tile_k(kp, tn, w_bytes)
    assert kp_chk == kp and kp % tk == 0 and np_ % tn == 0

    bp_rows = _round_up(batch, _SUBLANE)
    xp = x
    if bp_rows != batch or kp != k:
        xp = jnp.pad(x, ((0, bp_rows - batch), (0, kp - k)))

    n_tiles = np_ // tn
    k_tiles = kp // tk

    x_bytes = jnp.dtype(x.dtype).itemsize
    # Double-buffered input/output blocks + f32 accumulator scratch + margin.
    vmem_needed = (
        2 * (bp_rows * tk * x_bytes + tk * tn * w_bytes + tn * 4
             + bp_rows * tn * x_bytes)
        + bp_rows * tn * 4
    )
    vmem_limit = int(min(48 * 1024 * 1024,
                         max(vmem_needed + 4 * 1024 * 1024, 16 * 1024 * 1024)))

    cost = pl.CostEstimate(
        flops=2 * bp_rows * kp * np_,
        transcendentals=0,
        bytes_accessed=(kp * np_ * w_bytes
                        + bp_rows * kp * x_bytes
                        + bp_rows * np_ * x_bytes
                        + np_ * 4),
    )

    out = pl.pallas_call(
        _head_kernel,
        out_shape=jax.ShapeDtypeStruct((bp_rows, np_), x.dtype),
        grid_spec=pltpu.PrefetchScalarGridSpec(
            num_scalar_prefetch=0,
            grid=(n_tiles, k_tiles),
            in_specs=[
                pl.BlockSpec((bp_rows, tk), lambda n, kk: (0, kk)),   # x
                pl.BlockSpec((tk, tn), lambda n, kk: (kk, n)),        # weight
                pl.BlockSpec((1, tn), lambda n, kk: (0, n)),          # bias
            ],
            out_specs=pl.BlockSpec((bp_rows, tn), lambda n, kk: (0, n)),
            scratch_shapes=[pltpu.VMEM((bp_rows, tn), jnp.float32)],
        ),
        compiler_params=pltpu.CompilerParams(
            dimension_semantics=("parallel", "arbitrary"),
            vmem_limit_bytes=vmem_limit,
        ),
        cost_estimate=cost,
    )(xp, wp, bp)

    return out[:batch, :num_classes]


if __name__ == "__main__":
    # Small shapes consistent with Head(input_dim, num_classes).
    input_dim = 1024
    num_classes = 10
    batch = 4

    key = jax.random.PRNGKey(0)
    kx, kw, kb = jax.random.split(key, 3)

    # Deterministic parameter init mimicking nn.Linear (uniform +/- 1/sqrt(in)).
    bound = 1.0 / (input_dim ** 0.5)
    W = jax.random.uniform(
        kw, (num_classes, input_dim), jnp.float32, minval=-bound, maxval=bound
    )
    b = jax.random.uniform(
        kb, (num_classes,), jnp.float32, minval=-bound, maxval=bound
    )
    x = jax.random.normal(kx, (batch, input_dim), jnp.float32)

    ref = x @ W.T + b

    # Exact-numerics path (f32 weight streaming) -- matches nn.Linear tightly.
    wp32, bp32 = prepare_head_params(W, b, weight_dtype=jnp.float32)
    out32 = jax.block_until_ready(head_forward(x, wp32, bp32, num_classes))
    assert out32.shape == (batch, num_classes)
    assert jnp.allclose(out32, ref, rtol=1e-5, atol=1e-5)

    # Bandwidth-optimized path (bf16 weight streaming, f32 accumulate).
    wp16, bp16 = prepare_head_params(W, b)  # default bf16 weights
    out16 = jax.block_until_ready(head_forward(x, wp16, bp16, num_classes))
    assert out16.shape == (batch, num_classes)
    assert jnp.allclose(out16, ref, rtol=2e-2, atol=2e-2)

    print("KERNEL_OK")
</pallas_src>

<mosaic_0001>
module attributes {stable_mosaic.version = 11 : i64} {
  func.func @_head_kernel(%arg0: i32, %arg1: i32, %arg2: memref<8x1024xf32, #tpu.memory_space<vmem>>, %arg3: memref<1024x128xf32, #tpu.memory_space<vmem>>, %arg4: memref<1x128xf32, #tpu.memory_space<vmem>>, %arg5: memref<8x128xf32, #tpu.memory_space<vmem>>, %arg6: memref<8x128xf32, #tpu.memory_space<vmem>>) attributes {dimension_semantics = [#tpu.dimension_semantics<parallel>, #tpu.dimension_semantics<arbitrary>], iteration_bounds = array<i64: 1, 1>, scalar_prefetch = 0 : i64, scratch_operands = 1 : i64, tpu.core_type = #tpu.core_type<tc>, window_params = [{transform_indices = @transform_0, window_bounds = array<i64: 8, 1024>}, {transform_indices = @transform_1, window_bounds = array<i64: 1024, 128>}, {transform_indices = @transform_2, window_bounds = array<i64: 1, 128>}, {transform_indices = @transform_3, window_bounds = array<i64: 8, 128>}]} {
    %c0_i32 = arith.constant 0 : i32
    %0 = arith.cmpi eq, %arg1, %c0_i32 : i32
    %1 = arith.extui %0 : i1 to i32
    %c0_i32_0 = arith.constant 0 : i32
    %2 = arith.cmpi ne, %1, %c0_i32_0 : i32
    scf.if %2 {
      %cst_10 = arith.constant 0.000000e+00 : f32
      %12 = vector.broadcast %cst_10 : f32 to vector<8x128xf32>
      %c0_11 = arith.constant 0 : index
      %c0_12 = arith.constant 0 : index
      %13 = vector.load %arg6[%c0_11, %c0_12] : memref<8x128xf32, #tpu.memory_space<vmem>>, vector<8x128xf32>
      tpu.vector_store %arg6[%c0_11, %c0_12], %12 {strides = array<i32>} : memref<8x128xf32, #tpu.memory_space<vmem>>, vector<8x128xf32>,
    } else {
    }
    %c0 = arith.constant 0 : index
    %c0_1 = arith.constant 0 : index
    %3 = vector.load %arg6[%c0, %c0_1] : memref<8x128xf32, #tpu.memory_space<vmem>>, vector<8x128xf32>
    %c0_2 = arith.constant 0 : index
    %c0_3 = arith.constant 0 : index
    %4 = vector.load %arg2[%c0_2, %c0_3] : memref<8x1024xf32, #tpu.memory_space<vmem>>, vector<8x1024xf32>
    %c0_4 = arith.constant 0 : index
    %c0_5 = arith.constant 0 : index
    %5 = vector.load %arg3[%c0_4, %c0_5] : memref<1024x128xf32, #tpu.memory_space<vmem>>, vector<1024x128xf32>
    %cst = arith.constant dense<0.000000e+00> : vector<8x128xf32>
    %6 = tpu.matmul %4, %5, %cst {dimension_numbers = #tpu.dot_dimension_numbers<[1], [0], [0], [1], [0, 0, 1, 1], [], []>} : vector<8x1024xf32>, vector<1024x128xf32>, vector<8x128xf32> -> vector<8x128xf32>
    %7 = arith.addf %3, %6 : vector<8x128xf32>
    %c0_6 = arith.constant 0 : index
    %c0_7 = arith.constant 0 : index
    %8 = vector.load %arg6[%c0_6, %c0_7] : memref<8x128xf32, #tpu.memory_space<vmem>>, vector<8x128xf32>
    tpu.vector_store %arg6[%c0_6, %c0_7], %7 {strides = array<i32>} : memref<8x128xf32, #tpu.memory_space<vmem>>, vector<8x128xf32>,
    %c0_i32_8 = arith.constant 0 : i32
    %9 = arith.cmpi eq, %arg1, %c0_i32_8 : i32
    %10 = arith.extui %9 : i1 to i32
    %c0_i32_9 = arith.constant 0 : i32
    %11 = arith.cmpi ne, %10, %c0_i32_9 : i32
    scf.if %11 {
      %c0_10 = arith.constant 0 : index
      %c0_11 = arith.constant 0 : index
      %12 = vector.load %arg6[%c0_10, %c0_11] : memref<8x128xf32, #tpu.memory_space<vmem>>, vector<8x128xf32>
      %c0_12 = arith.constant 0 : index
      %c0_13 = arith.constant 0 : index
      %13 = vector.load %arg4[%c0_12, %c0_13] : memref<1x128xf32, #tpu.memory_space<vmem>>, vector<1x128xf32>
      %14 = vector.broadcast %13 : vector<1x128xf32> to vector<8x128xf32>
      %15 = arith.addf %12, %14 : vector<8x128xf32>
      %c0_14 = arith.constant 0 : index
      %c0_15 = arith.constant 0 : index
      %16 = vector.load %arg5[%c0_14, %c0_15] : memref<8x128xf32, #tpu.memory_space<vmem>>, vector<8x128xf32>
      tpu.vector_store %arg5[%c0_14, %c0_15], %15 {strides = array<i32>} : memref<8x128xf32, #tpu.memory_space<vmem>>, vector<8x128xf32>,
    } else {
    }
    return
  }
  func.func @transform_0(%arg0: i32, %arg1: i32) -> (i32, i32) {
    %c0_i32 = arith.constant 0 : i32
    %c0_i32_0 = arith.constant 0 : i32
    return %c0_i32, %arg1 : i32, i32
  }
  func.func @transform_1(%arg0: i32, %arg1: i32) -> (i32, i32) {
    %c0_i32 = arith.constant 0 : i32
    return %arg1, %arg0 : i32, i32
  }
  func.func @transform_2(%arg0: i32, %arg1: i32) -> (i32, i32) {
    %c0_i32 = arith.constant 0 : i32
    %c0_i32_0 = arith.constant 0 : i32
    return %c0_i32, %arg0 : i32, i32
  }
  func.func @transform_3(%arg0: i32, %arg1: i32) -> (i32, i32) {
    %c0_i32 = arith.constant 0 : i32
    %c0_i32_0 = arith.constant 0 : i32
    return %c0_i32, %arg0 : i32, i32
  }
}

</mosaic_0001>

<llo_original>
// kernel: head_forward.1
$region0: #{head_forward.1}
  #allocation0 [shape = 'u32[]', space=smem, size = 0x4, offset = 0x4, fixed_abs, tag = 'smem constant byte address 0x4 - core index']
  #allocation1 [shape = 'u32[144,128]{1,0:T(1,128)}', space=vmem, size = 0x12000, scoped, tag = 'internal scratch']
  #allocation2 [shape = 'f32[8,128]{1,0:T(8,128)}', space=vmem, size = 0x1000, scoped, tag = 'scratch operand']
  %s0 = inlined_call_operand.vmem [shape: f32[8,1024], index: 0, kind: input, shape index: {}]
  %s1 = inlined_call_operand.hbm [shape: f32[1024,128], index: 1, kind: input, shape index: {}]
  %s2 = inlined_call_operand.vmem [shape: f32[1,128], index: 2, kind: input, shape index: {}]
  %s3 = inlined_call_operand.vmem [shape: f32[8,128], index: 3, kind: output, shape index: {}]
  %s4 = sld [smem:[#allocation0]]
  $region34: #{head_forward.1} parent=0
    _
  %s6 = ssub.s32 1, %s4
  %s7 = scalar_select 0, %s6, %s4
  $region1: #{head_forward.1} parent=0
    #allocation3 [shape = 'u8[524288]{0}', space=vmem, size = 0x80000, scoped, tag = 'input window, operand 1, single buffered']
    #allocation4 [shape = 's32[1]{0}', space=sflag, size = 0x4, scoped, tag = 'scoped memory for head_forward.1']
    %8 = vsyncpa [#allocation4], 0
    // Predicated region
    $region2: #{head_forward.1} parent=1 // pred_check
      _
    $region3: #{head_forward.1} parent=1 // pred_check_branch
      %10 = sbr.rel (0) target = $region5
    $region4: #{head_forward.1} parent=1 // pred_region
      _
    $region5: #{head_forward.1} parent=1 // pred_fallthru
      _
    // Predicated region
    $region6: #{head_forward.1} parent=1 // pred_check
      _
    $region7: #{head_forward.1} parent=1 // pred_check_branch
      %12 = sbr.rel (0) target = $region9
    $region8: #{head_forward.1} parent=1 // pred_region
      %s14 = ssub.s32 16384, 16384
      %15 = vsyncadd [#allocation4], %s14
      %s16 = sshll.u32 [#allocation3], 4
      %s17 = int_to_ptr.vmem [resolvable:$true] %s16
      %22 = dma.hbm_to_vmem [thread:$0]  %s1, 16384, %s17, [#allocation4], 128, 128, 8
    $region9: #{head_forward.1} parent=1 // pred_fallthru
      _
    // Predicated region
    $region10: #{head_forward.1} parent=1 // pred_check
      _
    $region11: #{head_forward.1} parent=1 // pred_check_branch
      %24 = sbr.rel (0) target = $region13
    $region12: #{head_forward.1} parent=1 // pred_region
      _
    $region13: #{head_forward.1} parent=1 // pred_fallthru
      _
    // Predicated region
    $region14: #{head_forward.1} parent=1 // pred_check
      _
    $region15: #{head_forward.1} parent=1 // pred_check_branch
      %26 = sbr.rel (0) target = $region17
    $region16: #{head_forward.1} parent=1 // pred_region
      %27 = dma.done [#allocation4], 16384
    $region17: #{head_forward.1} parent=1 // pred_fallthru
      _
    %p28 = scmp.eq.s32.totalorder 0, 0
    // Predicated region
    $region18: #{head_forward.1} parent=1 // pred_check
      %p29 = pneg %p28
    $region19: #{head_forward.1} parent=1 // pred_check_branch
      %31 = sbr.rel (%p29) target = $region21
    $region20: #{head_forward.1} parent=1 // pred_region
      %32 = vst [vmem:[#allocation2] sm:$0xff] 0.0
    $region21: #{head_forward.1} parent=1 // pred_fallthru
      _
    %v33 = vld [vmem:[#allocation2] sm:$0xff]
    %v34 = vld [vmem:[%s0] sm:$0xff]
    %v35 = vld [vmem:[%s0 + $0x8] sm:$0xff]
    %v36 = vld [vmem:[%s0 + $0x10] sm:$0xff]
    %v37 = vld [vmem:[%s0 + $0x18] sm:$0xff]
    %v38 = vld [vmem:[%s0 + $0x20] sm:$0xff]
    %v39 = vld [vmem:[%s0 + $0x28] sm:$0xff]
    %v40 = vld [vmem:[%s0 + $0x30] sm:$0xff]
    %v41 = vld [vmem:[%s0 + $0x38] sm:$0xff]
    %v42 = vld [vmem:[#allocation3] sm:$0xff]
    %v43 = vld [vmem:[#allocation3 + $0x8] sm:$0xff]
    %v44 = vld [vmem:[#allocation3 + $0x10] sm:$0xff]
    %v45 = vld [vmem:[#allocation3 + $0x18] sm:$0xff]
    %v46 = vld [vmem:[#allocation3 + $0x20] sm:$0xff]
    %v47 = vld [vmem:[#allocation3 + $0x28] sm:$0xff]
    %v48 = vld [vmem:[#allocation3 + $0x30] sm:$0xff]
    %v49 = vld [vmem:[#allocation3 + $0x38] sm:$0xff]
    %v50 = vld [vmem:[#allocation3 + $0x40] sm:$0xff]
    %v51 = vld [vmem:[#allocation3 + $0x48] sm:$0xff]
    %v52 = vld [vmem:[#allocation3 + $0x50] sm:$0xff]
    %v53 = vld [vmem:[#allocation3 + $0x58] sm:$0xff]
    %v54 = vld [vmem:[#allocation3 + $0x60] sm:$0xff]
    %v55 = vld [vmem:[#allocation3 + $0x68] sm:$0xff]
    %v56 = vld [vmem:[#allocation3 + $0x70] sm:$0xff]
    %v57 = vld [vmem:[#allocation3 + $0x78] sm:$0xff]
    %v58 = vld [vmem:[#allocation3 + $0x80] sm:$0xff]
    %v59 = vld [vmem:[#allocation3 + $0x88] sm:$0xff]
    %v60 = vld [vmem:[#allocation3 + $0x90] sm:$0xff]
    %v61 = vld [vmem:[#allocation3 + $0x98] sm:$0xff]
    %v62 = vld [vmem:[#allocation3 + $0xa0] sm:$0xff]
    %v63 = vld [vmem:[#allocation3 + $0xa8] sm:$0xff]
    %v64 = vld [vmem:[#allocation3 + $0xb0] sm:$0xff]
    %v65 = vld [vmem:[#allocation3 + $0xb8] sm:$0xff]
    %v66 = vld [vmem:[#allocation3 + $0xc0] sm:$0xff]
    %v67 = vld [vmem:[#allocation3 + $0xc8] sm:$0xff]
    %v68 = vld [vmem:[#allocation3 + $0xd0] sm:$0xff]
    %v69 = vld [vmem:[#allocation3 + $0xd8] sm:$0xff]
    %v70 = vld [vmem:[#allocation3 + $0xe0] sm:$0xff]
    %v71 = vld [vmem:[#allocation3 + $0xe8] sm:$0xff]
    %v72 = vld [vmem:[#allocation3 + $0xf0] sm:$0xff]
    %v73 = vld [vmem:[#allocation3 + $0xf8] sm:$0xff]
    %v74 = vld [vmem:[#allocation3 + $0x100] sm:$0xff]
    %v75 = vld [vmem:[#allocation3 + $0x108] sm:$0xff]
    %v76 = vld [vmem:[#allocation3 + $0x110] sm:$0xff]
    %v77 = vld [vmem:[#allocation3 + $0x118] sm:$0xff]
    %v78 = vld [vmem:[#allocation3 + $0x120] sm:$0xff]
    %v79 = vld [vmem:[#allocation3 + $0x128] sm:$0xff]
    %v80 = vld [vmem:[#allocation3 + $0x130] sm:$0xff]
    %v81 = vld [vmem:[#allocation3 + $0x138] sm:$0xff]
    %v82 = vld [vmem:[#allocation3 + $0x140] sm:$0xff]
    %v83 = vld [vmem:[#allocation3 + $0x148] sm:$0xff]
    %v84 = vld [vmem:[#allocation3 + $0x150] sm:$0xff]
    %v85 = vld [vmem:[#allocation3 + $0x158] sm:$0xff]
    %v86 = vld [vmem:[#allocation3 + $0x160] sm:$0xff]
    %v87 = vld [vmem:[#allocation3 + $0x168] sm:$0xff]
    %v88 = vld [vmem:[#allocation3 + $0x170] sm:$0xff]
    %v89 = vld [vmem:[#allocation3 + $0x178] sm:$0xff]
    %v90 = vld [vmem:[#allocation3 + $0x180] sm:$0xff]
    %v91 = vld [vmem:[#allocation3 + $0x188] sm:$0xff]
    %v92 = vld [vmem:[#allocation3 + $0x190] sm:$0xff]
    %v93 = vld [vmem:[#allocation3 + $0x198] sm:$0xff]
    %v94 = vld [vmem:[#allocation3 + $0x1a0] sm:$0xff]
    %v95 = vld [vmem:[#allocation3 + $0x1a8] sm:$0xff]
    %v96 = vld [vmem:[#allocation3 + $0x1b0] sm:$0xff]
    %v97 = vld [vmem:[#allocation3 + $0x1b8] sm:$0xff]
    %v98 = vld [vmem:[#allocation3 + $0x1c0] sm:$0xff]
    %v99 = vld [vmem:[#allocation3 + $0x1c8] sm:$0xff]
    %v100 = vld [vmem:[#allocation3 + $0x1d0] sm:$0xff]
    %v101 = vld [vmem:[#allocation3 + $0x1d8] sm:$0xff]
    %v102 = vld [vmem:[#allocation3 + $0x1e0] sm:$0xff]
    %v103 = vld [vmem:[#allocation3 + $0x1e8] sm:$0xff]
    %v104 = vld [vmem:[#allocation3 + $0x1f0] sm:$0xff]
    %v105 = vld [vmem:[#allocation3 + $0x1f8] sm:$0xff]
    %v106 = vld [vmem:[#allocation3 + $0x200] sm:$0xff]
    %v107 = vld [vmem:[#allocation3 + $0x208] sm:$0xff]
    %v108 = vld [vmem:[#allocation3 + $0x210] sm:$0xff]
    %v109 = vld [vmem:[#allocation3 + $0x218] sm:$0xff]
    %v110 = vld [vmem:[#allocation3 + $0x220] sm:$0xff]
    %v111 = vld [vmem:[#allocation3 + $0x228] sm:$0xff]
    %v112 = vld [vmem:[#allocation3 + $0x230] sm:$0xff]
    %v113 = vld [vmem:[#allocation3 + $0x238] sm:$0xff]
    %v114 = vld [vmem:[#allocation3 + $0x240] sm:$0xff]
    %v115 = vld [vmem:[#allocation3 + $0x248] sm:$0xff]
    %v116 = vld [vmem:[#allocation3 + $0x250] sm:$0xff]
    %v117 = vld [vmem:[#allocation3 + $0x258] sm:$0xff]
    %v118 = vld [vmem:[#allocation3 + $0x260] sm:$0xff]
    %v119 = vld [vmem:[#allocation3 + $0x268] sm:$0xff]
    %v120 = vld [vmem:[#allocation3 + $0x270] sm:$0xff]
    %v121 = vld [vmem:[#allocation3 + $0x278] sm:$0xff]
    %v122 = vld [vmem:[#allocation3 + $0x280] sm:$0xff]
    %v123 = vld [vmem:[#allocation3 + $0x288] sm:$0xff]
    %v124 = vld [vmem:[#allocation3 + $0x290] sm:$0xff]
    %v125 = vld [vmem:[#allocation3 + $0x298] sm:$0xff]
    %v126 = vld [vmem:[#allocation3 + $0x2a0] sm:$0xff]
    %v127 = vld [vmem:[#allocation3 + $0x2a8] sm:$0xff]
    %v128 = vld [vmem:[#allocation3 + $0x2b0] sm:$0xff]
    %v129 = vld [vmem:[#allocation3 + $0x2b8] sm:$0xff]
    %v130 = vld [vmem:[#allocation3 + $0x2c0] sm:$0xff]
    %v131 = vld [vmem:[#allocation3 + $0x2c8] sm:$0xff]
    %v132 = vld [vmem:[#allocation3 + $0x2d0] sm:$0xff]
    %v133 = vld [vmem:[#allocation3 + $0x2d8] sm:$0xff]
    %v134 = vld [vmem:[#allocation3 + $0x2e0] sm:$0xff]
    %v135 = vld [vmem:[#allocation3 + $0x2e8] sm:$0xff]
    %v136 = vld [vmem:[#allocation3 + $0x2f0] sm:$0xff]
    %v137 = vld [vmem:[#allocation3 + $0x2f8] sm:$0xff]
    %v138 = vld [vmem:[#allocation3 + $0x300] sm:$0xff]
    %v139 = vld [vmem:[#allocation3 + $0x308] sm:$0xff]
    %v140 = vld [vmem:[#allocation3 + $0x310] sm:$0xff]
    %v141 = vld [vmem:[#allocation3 + $0x318] sm:$0xff]
    %v142 = vld [vmem:[#allocation3 + $0x320] sm:$0xff]
    %v143 = vld [vmem:[#allocation3 + $0x328] sm:$0xff]
    %v144 = vld [vmem:[#allocation3 + $0x330] sm:$0xff]
    %v145 = vld [vmem:[#allocation3 + $0x338] sm:$0xff]
    %v146 = vld [vmem:[#allocation3 + $0x340] sm:$0xff]
    %v147 = vld [vmem:[#allocation3 + $0x348] sm:$0xff]
    %v148 = vld [vmem:[#allocation3 + $0x350] sm:$0xff]
    %v149 = vld [vmem:[#allocation3 + $0x358] sm:$0xff]
    %v150 = vld [vmem:[#allocation3 + $0x360] sm:$0xff]
    %v151 = vld [vmem:[#allocation3 + $0x368] sm:$0xff]
    %v152 = vld [vmem:[#allocation3 + $0x370] sm:$0xff]
    %v153 = vld [vmem:[#allocation3 + $0x378] sm:$0xff]
    %v154 = vld [vmem:[#allocation3 + $0x380] sm:$0xff]
    %v155 = vld [vmem:[#allocation3 + $0x388] sm:$0xff]
    %v156 = vld [vmem:[#allocation3 + $0x390] sm:$0xff]
    %v157 = vld [vmem:[#allocation3 + $0x398] sm:$0xff]
    %v158 = vld [vmem:[#allocation3 + $0x3a0] sm:$0xff]
    %v159 = vld [vmem:[#allocation3 + $0x3a8] sm:$0xff]
    %v160 = vld [vmem:[#allocation3 + $0x3b0] sm:$0xff]
    %v161 = vld [vmem:[#allocation3 + $0x3b8] sm:$0xff]
    %v162 = vld [vmem:[#allocation3 + $0x3c0] sm:$0xff]
    %v163 = vld [vmem:[#allocation3 + $0x3c8] sm:$0xff]
    %v164 = vld [vmem:[#allocation3 + $0x3d0] sm:$0xff]
    %v165 = vld [vmem:[#allocation3 + $0x3d8] sm:$0xff]
    %v166 = vld [vmem:[#allocation3 + $0x3e0] sm:$0xff]
    %v167 = vld [vmem:[#allocation3 + $0x3e8] sm:$0xff]
    %v168 = vld [vmem:[#allocation3 + $0x3f0] sm:$0xff]
    %v169 = vld [vmem:[#allocation3 + $0x3f8] sm:$0xff]
    %170 = vmatprep.subr.mxu0 0.0
    %171 = vmatpush1.msra.mxu0 %v42
    %172 = vmatprep.subr.mxu0 0.0
    %173 = vmatpush1.msra.mxu0 %v43
    %174 = vmatprep.subr.mxu0 0.0
    %175 = vmatpush1.msra.mxu0 %v44
    %176 = vmatprep.subr.mxu0 0.0
    %177 = vmatpush1.msra.mxu0 %v45
    %178 = vmatprep.subr.mxu0 0.0
    %179 = vmatpush1.msra.mxu0 %v46
    %180 = vmatprep.subr.mxu0 0.0
    %181 = vmatpush1.msra.mxu0 %v47
    %182 = vmatprep.subr.mxu0 0.0
    %183 = vmatpush1.msra.mxu0 %v48
    %184 = vmatprep.subr.mxu0 0.0
    %185 = vmatpush1.msra.mxu0 %v49
    %186 = vmatprep.subr.mxu0 0.0
    %187 = vmatpush1.msra.mxu0 %v50
    %188 = vmatprep.subr.mxu0 0.0
    %189 = vmatpush1.msra.mxu0 %v51
    %190 = vmatprep.subr.mxu0 0.0
    %191 = vmatpush1.msra.mxu0 %v52
    %192 = vmatprep.subr.mxu0 0.0
    %193 = vmatpush1.msra.mxu0 %v53
    %194 = vmatprep.subr.mxu0 0.0
    %195 = vmatpush1.msra.mxu0 %v54
    %196 = vmatprep.subr.mxu0 0.0
    %197 = vmatpush1.msra.mxu0 %v55
    %198 = vmatprep.subr.mxu0 0.0
    %199 = vmatpush1.msra.mxu0 %v56
    %200 = vmatprep.subr.mxu0 0.0
    %201 = vmatpush1.msra.mxu0 %v57
    %202 = vmatprep.subr.mxu0 0.0
    %203 = vmatpush1.msra.mxu0 %v58
    %204 = vmatprep.subr.mxu0 0.0
    %205 = vmatpush1.msra.mxu0 %v59
    %206 = vmatprep.subr.mxu0 0.0
    %207 = vmatpush1.msra.mxu0 %v60
    %208 = vmatprep.subr.mxu0 0.0
    %209 = vmatpush1.msra.mxu0 %v61
    %210 = vmatprep.subr.mxu0 0.0
    %211 = vmatpush1.msra.mxu0 %v62
    %212 = vmatprep.subr.mxu0 0.0
    %213 = vmatpush1.msra.mxu0 %v63
    %214 = vmatprep.subr.mxu0 0.0
    %215 = vmatpush1.msra.mxu0 %v64
    %216 = vmatprep.subr.mxu0 0.0
    %217 = vmatpush1.msra.mxu0 %v65
    %218 = vmatprep.subr.mxu0 0.0
    %219 = vmatpush1.msra.mxu0 %v66
    %220 = vmatprep.subr.mxu0 0.0
    %221 = vmatpush1.msra.mxu0 %v67
    %222 = vmatprep.subr.mxu0 0.0
    %223 = vmatpush1.msra.mxu0 %v68
    %224 = vmatprep.subr.mxu0 0.0
    %225 = vmatpush1.msra.mxu0 %v69
    %226 = vmatprep.subr.mxu0 0.0
    %227 = vmatpush1.msra.mxu0 %v70
    %228 = vmatprep.subr.mxu0 0.0
    %229 = vmatpush1.msra.mxu0 %v71
    %230 = vmatprep.subr.mxu0 0.0
    %231 = vmatpush1.msra.mxu0 %v72
    %232 = vmatprep.subr.mxu0 0.0
    %233 = vmatpush1.msra.mxu0 %v73
    %234 = vmatprep.mubr.f32.mxu0 %v35
    %235 = vmatmul.mubr.f32.gmra.mrb[0].mxu0 %v34
    %v236 = vpop.f32.mrb[0].mxu0
    %v237 = vadd.f32 0.0, %v236
    %v238 = vpop.f32.mrb[0].mxu0
    %239 = vdwg.mxu0
    %240 = vmatprep.subr.mxu0 0.0
    %241 = vmatpush1.msra.mxu0 %v74
    %242 = vmatprep.subr.mxu0 0.0
    %243 = vmatpush1.msra.mxu0 %v75
    %244 = vmatprep.subr.mxu0 0.0
    %245 = vmatpush1.msra.mxu0 %v76
    %246 = vmatprep.subr.mxu0 0.0
    %247 = vmatpush1.msra.mxu0 %v77
    %248 = vmatprep.subr.mxu0 0.0
    %249 = vmatpush1.msra.mxu0 %v78
    %250 = vmatprep.subr.mxu0 0.0
    %251 = vmatpush1.msra.mxu0 %v79
    %252 = vmatprep.subr.mxu0 0.0
    %253 = vmatpush1.msra.mxu0 %v80
    %254 = vmatprep.subr.mxu0 0.0
    %255 = vmatpush1.msra.mxu0 %v81
    %256 = vmatprep.subr.mxu0 0.0
    %257 = vmatpush1.msra.mxu0 %v82
    %258 = vmatprep.subr.mxu0 0.0
    %259 = vmatpush1.msra.mxu0 %v83
    %260 = vmatprep.subr.mxu0 0.0
    %261 = vmatpush1.msra.mxu0 %v84
    %262 = vmatprep.subr.mxu0 0.0
    %263 = vmatpush1.msra.mxu0 %v85
    %264 = vmatprep.subr.mxu0 0.0
    %265 = vmatpush1.msra.mxu0 %v86
    %266 = vmatprep.subr.mxu0 0.0
    %267 = vmatpush1.msra.mxu0 %v87
    %268 = vmatprep.subr.mxu0 0.0
    %269 = vmatpush1.msra.mxu0 %v88
    %270 = vmatprep.subr.mxu0 0.0
    %271 = vmatpush1.msra.mxu0 %v89
    %272 = vmatprep.subr.mxu0 0.0
    %273 = vmatpush1.msra.mxu0 %v90
    %274 = vmatprep.subr.mxu0 0.0
    %275 = vmatpush1.msra.mxu0 %v91
    %276 = vmatprep.subr.mxu0 0.0
    %277 = vmatpush1.msra.mxu0 %v92
    %278 = vmatprep.subr.mxu0 0.0
    %279 = vmatpush1.msra.mxu0 %v93
    %280 = vmatprep.subr.mxu0 0.0
    %281 = vmatpush1.msra.mxu0 %v94
    %282 = vmatprep.subr.mxu0 0.0
    %283 = vmatpush1.msra.mxu0 %v95
    %284 = vmatprep.subr.mxu0 0.0
    %285 = vmatpush1.msra.mxu0 %v96
    %286 = vmatprep.subr.mxu0 0.0
    %287 = vmatpush1.msra.mxu0 %v97
    %288 = vmatprep.subr.mxu0 0.0
    %289 = vmatpush1.msra.mxu0 %v98
    %290 = vmatprep.subr.mxu0 0.0
    %291 = vmatpush1.msra.mxu0 %v99
    %292 = vmatprep.subr.mxu0 0.0
    %293 = vmatpush1.msra.mxu0 %v100
    %294 = vmatprep.subr.mxu0 0.0
    %295 = vmatpush1.msra.mxu0 %v101
    %296 = vmatprep.subr.mxu0 0.0
    %297 = vmatpush1.msra.mxu0 %v102
    %298 = vmatprep.subr.mxu0 0.0
    %299 = vmatpush1.msra.mxu0 %v103
    %300 = vmatprep.subr.mxu0 0.0
    %301 = vmatpush1.msra.mxu0 %v104
    %302 = vmatprep.subr.mxu0 0.0
    %303 = vmatpush1.msra.mxu0 %v105
    %304 = vmatprep.mubr.f32.mxu0 %v37
    %305 = vmatmul.mubr.f32.gmra.mrb[0].mxu0 %v36
    %v306 = vpop.f32.mrb[0].mxu0
    %v307 = vadd.f32 %v237, %v306
    %v308 = vpop.f32.mrb[0].mxu0
    %309 = vdwg.mxu0
    %310 = vmatprep.subr.mxu0 0.0
    %311 = vmatpush1.msra.mxu0 %v106
    %312 = vmatprep.subr.mxu0 0.0
    %313 = vmatpush1.msra.mxu0 %v107
    %314 = vmatprep.subr.mxu0 0.0
    %315 = vmatpush1.msra.mxu0 %v108
    %316 = vmatprep.subr.mxu0 0.0
    %317 = vmatpush1.msra.mxu0 %v109
    %318 = vmatprep.subr.mxu0 0.0
    %319 = vmatpush1.msra.mxu0 %v110
    %320 = vmatprep.subr.mxu0 0.0
    %321 = vmatpush1.msra.mxu0 %v111
    %322 = vmatprep.subr.mxu0 0.0
    %323 = vmatpush1.msra.mxu0 %v112
    %324 = vmatprep.subr.mxu0 0.0
    %325 = vmatpush1.msra.mxu0 %v113
    %326 = vmatprep.subr.mxu0 0.0
    %327 = vmatpush1.msra.mxu0 %v114
    %328 = vmatprep.subr.mxu0 0.0
    %329 = vmatpush1.msra.mxu0 %v115
    %330 = vmatprep.subr.mxu0 0.0
    %331 = vmatpush1.msra.mxu0 %v116
    %332 = vmatprep.subr.mxu0 0.0
    %333 = vmatpush1.msra.mxu0 %v117
    %334 = vmatprep.subr.mxu0 0.0
    %335 = vmatpush1.msra.mxu0 %v118
    %336 = vmatprep.subr.mxu0 0.0
    %337 = vmatpush1.msra.mxu0 %v119
    %338 = vmatprep.subr.mxu0 0.0
    %339 = vmatpush1.msra.mxu0 %v120
    %340 = vmatprep.subr.mxu0 0.0
    %341 = vmatpush1.msra.mxu0 %v121
    %342 = vmatprep.subr.mxu0 0.0
    %343 = vmatpush1.msra.mxu0 %v122
    %344 = vmatprep.subr.mxu0 0.0
    %345 = vmatpush1.msra.mxu0 %v123
    %346 = vmatprep.subr.mxu0 0.0
    %347 = vmatpush1.msra.mxu0 %v124
    %348 = vmatprep.subr.mxu0 0.0
    %349 = vmatpush1.msra.mxu0 %v125
    %350 = vmatprep.subr.mxu0 0.0
    %351 = vmatpush1.msra.mxu0 %v126
    %352 = vmatprep.subr.mxu0 0.0
    %353 = vmatpush1.msra.mxu0 %v127
    %354 = vmatprep.subr.mxu0 0.0
    %355 = vmatpush1.msra.mxu0 %v128
    %356 = vmatprep.subr.mxu0 0.0
    %357 = vmatpush1.msra.mxu0 %v129
    %358 = vmatprep.subr.mxu0 0.0
    %359 = vmatpush1.msra.mxu0 %v130
    %360 = vmatprep.subr.mxu0 0.0
    %361 = vmatpush1.msra.mxu0 %v131
    %362 = vmatprep.subr.mxu0 0.0
    %363 = vmatpush1.msra.mxu0 %v132
    %364 = vmatprep.subr.mxu0 0.0
    %365 = vmatpush1.msra.mxu0 %v133
    %366 = vmatprep.subr.mxu0 0.0
    %367 = vmatpush1.msra.mxu0 %v134
    %368 = vmatprep.subr.mxu0 0.0
    %369 = vmatpush1.msra.mxu0 %v135
    %370 = vmatprep.subr.mxu0 0.0
    %371 = vmatpush1.msra.mxu0 %v136
    %372 = vmatprep.subr.mxu0 0.0
    %373 = vmatpush1.msra.mxu0 %v137
    %374 = vmatprep.mubr.f32.mxu0 %v39
    %375 = vmatmul.mubr.f32.gmra.mrb[0].mxu0 %v38
    %v376 = vpop.f32.mrb[0].mxu0
    %v377 = vadd.f32 %v307, %v376
    %v378 = vpop.f32.mrb[0].mxu0
    %379 = vdwg.mxu0
    %380 = vmatprep.subr.mxu0 0.0
    %381 = vmatpush1.msra.mxu0 %v138
    %382 = vmatprep.subr.mxu0 0.0
    %383 = vmatpush1.msra.mxu0 %v139
    %384 = vmatprep.subr.mxu0 0.0
    %385 = vmatpush1.msra.mxu0 %v140
    %386 = vmatprep.subr.mxu0 0.0
    %387 = vmatpush1.msra.mxu0 %v141
    %388 = vmatprep.subr.mxu0 0.0
    %389 = vmatpush1.msra.mxu0 %v142
    %390 = vmatprep.subr.mxu0 0.0
    %391 = vmatpush1.msra.mxu0 %v143
    %392 = vmatprep.subr.mxu0 0.0
    %393 = vmatpush1.msra.mxu0 %v144
    %394 = vmatprep.subr.mxu0 0.0
    %395 = vmatpush1.msra.mxu0 %v145
    %396 = vmatprep.subr.mxu0 0.0
    %397 = vmatpush1.msra.mxu0 %v146
    %398 = vmatprep.subr.mxu0 0.0
    %399 = vmatpush1.msra.mxu0 %v147
    %400 = vmatprep.subr.mxu0 0.0
    %401 = vmatpush1.msra.mxu0 %v148
    %402 = vmatprep.subr.mxu0 0.0
    %403 = vmatpush1.msra.mxu0 %v149
    %404 = vmatprep.subr.mxu0 0.0
    %405 = vmatpush1.msra.mxu0 %v150
    %406 = vmatprep.subr.mxu0 0.0
    %407 = vmatpush1.msra.mxu0 %v151
    %408 = vmatprep.subr.mxu0 0.0
    %409 = vmatpush1.msra.mxu0 %v152
    %410 = vmatprep.subr.mxu0 0.0
    %411 = vmatpush1.msra.mxu0 %v153
    %412 = vmatprep.subr.mxu0 0.0
    %413 = vmatpush1.msra.mxu0 %v154
    %414 = vmatprep.subr.mxu0 0.0
    %415 = vmatpush1.msra.mxu0 %v155
    %416 = vmatprep.subr.mxu0 0.0
    %417 = vmatpush1.msra.mxu0 %v156
    %418 = vmatprep.subr.mxu0 0.0
    %419 = vmatpush1.msra.mxu0 %v157
    %420 = vmatprep.subr.mxu0 0.0
    %421 = vmatpush1.msra.mxu0 %v158
    %422 = vmatprep.subr.mxu0 0.0
    %423 = vmatpush1.msra.mxu0 %v159
    %424 = vmatprep.subr.mxu0 0.0
    %425 = vmatpush1.msra.mxu0 %v160
    %426 = vmatprep.subr.mxu0 0.0
    %427 = vmatpush1.msra.mxu0 %v161
    %428 = vmatprep.subr.mxu0 0.0
    %429 = vmatpush1.msra.mxu0 %v162
    %430 = vmatprep.subr.mxu0 0.0
    %431 = vmatpush1.msra.mxu0 %v163
    %432 = vmatprep.subr.mxu0 0.0
    %433 = vmatpush1.msra.mxu0 %v164
    %434 = vmatprep.subr.mxu0 0.0
    %435 = vmatpush1.msra.mxu0 %v165
    %436 = vmatprep.subr.mxu0 0.0
    %437 = vmatpush1.msra.mxu0 %v166
    %438 = vmatprep.subr.mxu0 0.0
    %439 = vmatpush1.msra.mxu0 %v167
    %440 = vmatprep.subr.mxu0 0.0
    %441 = vmatpush1.msra.mxu0 %v168
    %442 = vmatprep.subr.mxu0 0.0
    %443 = vmatpush1.msra.mxu0 %v169
    %444 = vmatprep.mubr.f32.mxu0 %v41
    %445 = vmatmul.mubr.f32.gmra.mrb[0].mxu0 %v40
    %v446 = vpop.f32.mrb[0].mxu0
    %v447 = vadd.f32 %v377, %v446
    %v448 = vpop.f32.mrb[0].mxu0
    %449 = vdwg.mxu0
    %v450 = vadd.f32 %v33, %v447
    %451 = vst [vmem:[#allocation2] sm:$0xff] %v450
    // Predicated region
    $region22: #{head_forward.1} parent=1 // pred_check
      %p452 = pneg %p28
    $region23: #{head_forward.1} parent=1 // pred_check_branch
      %454 = sbr.rel (%p452) target = $region25
    $region24: #{head_forward.1} parent=1 // pred_region
      %v455 = vld [vmem:[#allocation2] sm:$0xff]
      %v456 = vld [vmem:[%s2] sm:$0x1]
      %v458 = vlaneseq
      %v459 = vshrl.u32 %v458, 7
      %v460 = vsub.s32 0, %v459
      %v461 = vrot.slane %v456, %v460
      %v463 = vadd.f32 %v455, %v461
      %464 = vst [vmem:[%s3] sm:$0xff] %v463
    $region25: #{head_forward.1} parent=1 // pred_fallthru
      _
    // Predicated region
    $region26: #{head_forward.1} parent=1 // pred_check
      _
    $region27: #{head_forward.1} parent=1 // pred_check_branch
      %466 = sbr.rel (0) target = $region29
    $region28: #{head_forward.1} parent=1 // pred_region
      _
    $region29: #{head_forward.1} parent=1 // pred_fallthru
      _
    // Predicated region
    $region30: #{head_forward.1} parent=1 // pred_check
      _
    $region31: #{head_forward.1} parent=1 // pred_check_branch
      %468 = sbr.rel (0) target = $region33
    $region32: #{head_forward.1} parent=1 // pred_region
      _
    $region33: #{head_forward.1} parent=1 // pred_fallthru
      _
    %469 = vsyncpa [#allocation4], 1

</llo_original>
